<compile_context>
chip_gen: v7x
topology: tpu7x:2x2x1
jax: 0.10.0
libtpu: 0.0.40
codegen_flags: <defaults>
</compile_context>

<pallas_src>
import jax
import jax.numpy as jnp
from jax.experimental import pallas as pl
from jax.experimental.pallas import tpu as pltpu


LN_EPS = 1e-5          # torch.nn.LayerNorm default
VAR_CLAMP_MIN = 1e-6


# ----------------------------------------------------------------------------
# Kernel
# ----------------------------------------------------------------------------
def _emergent_threshold_kernel(alpha_ref, x_ref, lnw_ref, lnb_ref, thr_ref, o_ref):
    """Fused LayerNorm -> adaptive soft-threshold gate -> mix -> clamp for one token tile."""
    x = x_ref[...].astype(jnp.float32)                      # (tile, D)

    # LayerNorm over the feature (lane) dim.
    mu = jnp.mean(x, axis=-1, keepdims=True)
    xc = x - mu
    var = jnp.mean(xc * xc, axis=-1, keepdims=True)
    xn = xc * jax.lax.rsqrt(var + LN_EPS) * lnw_ref[...] + lnb_ref[...]

    # Gate against the precomputed per-feature threshold (EUP sigmoid is a free slot).
    gate = jax.nn.sigmoid(jnp.abs(xn) - thr_ref[...])       # (tile, D)

    # Mix with the ORIGINAL x:  x * (alpha*gate + (1 - alpha))  ==  alpha*gate*x + (1-alpha)*x
    alpha = alpha_ref[0]
    y = x * (alpha * gate + (1.0 - alpha))
    o_ref[...] = jnp.clip(y, -100.0, 100.0).astype(o_ref.dtype)


# ----------------------------------------------------------------------------
# Wrapper
# ----------------------------------------------------------------------------
def _round_up(a, m):
    return (a + m - 1) // m * m


def _choose_tile(n_rows, d, itemsize, vmem_block_budget):
    """Token-tile rows: as large as the VMEM budget allows, but always >=2 grid steps."""
    # 2 double-buffered input blocks + 2 double-buffered output blocks of (tile, d).
    bytes_per_row = 4 * d * itemsize
    budget_rows = max(8, (vmem_block_budget // bytes_per_row) // 8 * 8)
    # Keep at least 2 grid steps so v7x's two TensorCores both get work.
    half_rows = _round_up(max(pl.cdiv(n_rows, 2), 1), 8)
    return max(8, min(budget_rows, half_rows))


def emergent_threshold_forward(x, ln_w, ln_b, running_var, adaptive_threshold,
                               *, vmem_block_budget=16 * 1024 * 1024):
    """x: (..., D).  Parameters follow the PyTorch module (eval mode)."""
    orig_shape = x.shape
    d = orig_shape[-1]
    x2d = x.reshape(-1, d)                 # free (contiguous) reshape
    n = x2d.shape[0]

    # Scalar alpha (SMEM) and hoisted per-feature threshold / LN params as (1, D) rows.
    alpha = jax.nn.sigmoid(adaptive_threshold.astype(jnp.float32)).reshape(1)
    thr2 = (alpha * jnp.sqrt(jnp.maximum(running_var.astype(jnp.float32),
                                         VAR_CLAMP_MIN))).reshape(1, d)
    lnw2 = ln_w.reshape(1, d).astype(jnp.float32)
    lnb2 = ln_b.reshape(1, d).astype(jnp.float32)

    tile = _choose_tile(n, d, jnp.dtype(x.dtype).itemsize, vmem_block_budget)
    grid = (pl.cdiv(n, tile),)             # partial tail block handled by Mosaic (no pad/slice)

    out = pl.pallas_call(
        _emergent_threshold_kernel,
        out_shape=jax.ShapeDtypeStruct((n, d), x.dtype),
        grid=grid,
        in_specs=[
            pl.BlockSpec(memory_space=pltpu.MemorySpace.SMEM),   # alpha scalar
            pl.BlockSpec((tile, d), lambda i: (i, 0)),           # x token tile (streamed)
            pl.BlockSpec((1, d), lambda i: (0, 0)),              # LN weight
            pl.BlockSpec((1, d), lambda i: (0, 0)),              # LN bias
            pl.BlockSpec((1, d), lambda i: (0, 0)),              # precomputed threshold
        ],
        out_specs=pl.BlockSpec((tile, d), lambda i: (i, 0)),
        compiler_params=pltpu.CompilerParams(
            dimension_semantics=("parallel",),
            vmem_limit_bytes=32 * 1024 * 1024,
        ),
    )(alpha, x2d, lnw2, lnb2, thr2)

    return out.reshape(orig_shape)


# ----------------------------------------------------------------------------
# Pure-JAX reference (mirrors the PyTorch eval-mode forward).
# ----------------------------------------------------------------------------
def emergent_threshold_ref(x, ln_w, ln_b, running_var, adaptive_threshold):
    mu = jnp.mean(x, axis=-1, keepdims=True)
    var = jnp.mean((x - mu) ** 2, axis=-1, keepdims=True)
    xn = (x - mu) / jnp.sqrt(var + LN_EPS) * ln_w + ln_b
    alpha = jax.nn.sigmoid(adaptive_threshold)
    thr = alpha * jnp.sqrt(jnp.maximum(running_var, VAR_CLAMP_MIN))
    gate = jax.nn.sigmoid(jnp.abs(xn) - thr)
    return jnp.clip(alpha * (gate * x) + (1.0 - alpha) * x, -100.0, 100.0)


# ----------------------------------------------------------------------------
# Test
# ----------------------------------------------------------------------------
def _make_params(key, feature_dim):
    k1, k2, k3 = jax.random.split(key, 3)
    ln_w = 1.0 + 0.1 * jax.random.normal(k1, (feature_dim,), jnp.float32)
    ln_b = 0.05 * jax.random.normal(k2, (feature_dim,), jnp.float32)
    running_var = jax.random.uniform(k3, (feature_dim,), jnp.float32, 0.5, 1.5)
    adaptive_threshold = jnp.full((1,), 0.5, jnp.float32)   # nn.Parameter(torch.ones(1)*0.5)
    return ln_w, ln_b, running_var, adaptive_threshold


if __name__ == "__main__":
    run = jax.jit(emergent_threshold_forward)
    key = jax.random.PRNGKey(0)

    # Case 1: main case — lane-dense feature dim (D=128), token count multiple of 8.
    key, kx1, kp1 = jax.random.split(key, 3)
    x1 = jax.random.normal(kx1, (2, 8, 128), jnp.float32)
    p1 = _make_params(kp1, 128)
    out1 = jax.block_until_ready(run(x1, *p1))
    ref1 = emergent_threshold_ref(x1, *p1)
    assert out1.shape == x1.shape
    assert jnp.allclose(out1, ref1, atol=1e-4, rtol=1e-4), "mismatch vs reference (case 1)"

    # Case 2: ragged token count (N=15) — exercises the padless partial tail block.
    key, kx2, kp2 = jax.random.split(key, 3)
    x2 = jax.random.normal(kx2, (3, 5, 128), jnp.float32)
    p2 = _make_params(kp2, 128)
    out2 = jax.block_until_ready(run(x2, *p2))
    ref2 = emergent_threshold_ref(x2, *p2)
    assert out2.shape == x2.shape
    assert jnp.allclose(out2, ref2, atol=1e-4, rtol=1e-4), "mismatch vs reference (case 2)"

    # Case 3: narrow feature dim (D=32) fallback path (documented masked-store penalty).
    key, kx3, kp3 = jax.random.split(key, 3)
    x3 = jax.random.normal(kx3, (2, 7, 32), jnp.float32)
    p3 = _make_params(kp3, 32)
    out3 = jax.block_until_ready(run(x3, *p3))
    ref3 = emergent_threshold_ref(x3, *p3)
    assert out3.shape == x3.shape
    assert jnp.allclose(out3, ref3, atol=1e-4, rtol=1e-4), "mismatch vs reference (case 3)"

    print("KERNEL_OK")
</pallas_src>

<mosaic_0001>
module attributes {stable_mosaic.version = 11 : i64} {
  func.func @_emergent_threshold_kernel(%arg0: i32, %arg1: memref<1xf32, #tpu.memory_space<smem>>, %arg2: memref<8x128xf32, #tpu.memory_space<vmem>>, %arg3: memref<1x128xf32, #tpu.memory_space<vmem>>, %arg4: memref<1x128xf32, #tpu.memory_space<vmem>>, %arg5: memref<1x128xf32, #tpu.memory_space<vmem>>, %arg6: memref<8x128xf32, #tpu.memory_space<vmem>>) attributes {dimension_semantics = [#tpu.dimension_semantics<parallel>], iteration_bounds = array<i64: 2>, scalar_prefetch = 0 : i64, scratch_operands = 0 : i64, tpu.core_type = #tpu.core_type<tc>, window_params = [{transform_indices = @transform_0, window_bounds = array<i64: 1>}, {transform_indices = @transform_1, window_bounds = array<i64: 8, 128>}, {pipeline_mode = #tpu.pipeline_mode<synchronous>, transform_indices = @transform_2, window_bounds = array<i64: 1, 128>}, {pipeline_mode = #tpu.pipeline_mode<synchronous>, transform_indices = @transform_3, window_bounds = array<i64: 1, 128>}, {pipeline_mode = #tpu.pipeline_mode<synchronous>, transform_indices = @transform_4, window_bounds = array<i64: 1, 128>}, {transform_indices = @transform_5, window_bounds = array<i64: 8, 128>}]} {
    %c0 = arith.constant 0 : index
    %c0_0 = arith.constant 0 : index
    %0 = vector.load %arg2[%c0, %c0_0] : memref<8x128xf32, #tpu.memory_space<vmem>>, vector<8x128xf32>
    %cst = arith.constant dense<0.000000e+00> : vector<8xf32>
    %1 = vector.multi_reduction <add>, %0, %cst [1] : vector<8x128xf32> to vector<8xf32>
    %2 = vector.shape_cast %1 : vector<8xf32> to vector<8x1xf32>
    %cst_1 = arith.constant 1.280000e+02 : f32
    %3 = vector.broadcast %cst_1 : f32 to vector<8x1xf32>
    %4 = arith.divf %2, %3 : vector<8x1xf32>
    %5 = vector.broadcast %4 : vector<8x1xf32> to vector<8x128xf32>
    %6 = arith.subf %0, %5 : vector<8x128xf32>
    %7 = arith.mulf %6, %6 : vector<8x128xf32>
    %cst_2 = arith.constant dense<0.000000e+00> : vector<8xf32>
    %8 = vector.multi_reduction <add>, %7, %cst_2 [1] : vector<8x128xf32> to vector<8xf32>
    %9 = vector.shape_cast %8 : vector<8xf32> to vector<8x1xf32>
    %cst_3 = arith.constant 1.280000e+02 : f32
    %10 = vector.broadcast %cst_3 : f32 to vector<8x1xf32>
    %11 = arith.divf %9, %10 : vector<8x1xf32>
    %cst_4 = arith.constant 9.99999974E-6 : f32
    %12 = vector.broadcast %cst_4 : f32 to vector<8x1xf32>
    %13 = arith.addf %11, %12 : vector<8x1xf32>
    %14 = math.rsqrt %13 : vector<8x1xf32>
    %15 = vector.broadcast %14 : vector<8x1xf32> to vector<8x128xf32>
    %16 = arith.mulf %6, %15 : vector<8x128xf32>
    %c0_5 = arith.constant 0 : index
    %c0_6 = arith.constant 0 : index
    %17 = vector.load %arg3[%c0_5, %c0_6] : memref<1x128xf32, #tpu.memory_space<vmem>>, vector<1x128xf32>
    %18 = vector.broadcast %17 : vector<1x128xf32> to vector<8x128xf32>
    %19 = arith.mulf %16, %18 : vector<8x128xf32>
    %c0_7 = arith.constant 0 : index
    %c0_8 = arith.constant 0 : index
    %20 = vector.load %arg4[%c0_7, %c0_8] : memref<1x128xf32, #tpu.memory_space<vmem>>, vector<1x128xf32>
    %21 = vector.broadcast %20 : vector<1x128xf32> to vector<8x128xf32>
    %22 = arith.addf %19, %21 : vector<8x128xf32>
    %23 = math.absf %22 : vector<8x128xf32>
    %c0_9 = arith.constant 0 : index
    %c0_10 = arith.constant 0 : index
    %24 = vector.load %arg5[%c0_9, %c0_10] : memref<1x128xf32, #tpu.memory_space<vmem>>, vector<1x128xf32>
    %25 = vector.broadcast %24 : vector<1x128xf32> to vector<8x128xf32>
    %26 = arith.subf %23, %25 : vector<8x128xf32>
    %27 = arith.negf %26 : vector<8x128xf32>
    %28 = math.exp %27 : vector<8x128xf32>
    %cst_11 = arith.constant 1.000000e+00 : f32
    %29 = vector.broadcast %cst_11 : f32 to vector<8x128xf32>
    %30 = arith.addf %29, %28 : vector<8x128xf32>
    %31 = arith.divf %29, %30 : vector<8x128xf32>
    %c0_12 = arith.constant 0 : index
    %32 = memref.load %arg1[%c0_12] : memref<1xf32, #tpu.memory_space<smem>>
    %33 = vector.broadcast %32 : f32 to vector<8x128xf32>
    %34 = arith.mulf %33, %31 : vector<8x128xf32>
    %cst_13 = arith.constant 1.000000e+00 : f32
    %35 = arith.subf %cst_13, %32 : f32
    %36 = vector.broadcast %35 : f32 to vector<8x128xf32>
    %37 = arith.addf %34, %36 : vector<8x128xf32>
    %38 = arith.mulf %0, %37 : vector<8x128xf32>
    %cst_14 = arith.constant -1.000000e+02 : f32
    %cst_15 = arith.constant 1.000000e+02 : f32
    %39 = vector.broadcast %cst_14 : f32 to vector<8x128xf32>
    %40 = arith.maximumf %39, %38 : vector<8x128xf32>
    %41 = vector.broadcast %cst_15 : f32 to vector<8x128xf32>
    %42 = arith.minimumf %41, %40 : vector<8x128xf32>
    %c0_16 = arith.constant 0 : index
    %c0_17 = arith.constant 0 : index
    %43 = vector.load %arg6[%c0_16, %c0_17] : memref<8x128xf32, #tpu.memory_space<vmem>>, vector<8x128xf32>
    tpu.vector_store %arg6[%c0_16, %c0_17], %42 {strides = array<i32>} : memref<8x128xf32, #tpu.memory_space<vmem>>, vector<8x128xf32>,
    return
  }
  func.func @transform_0(%arg0: i32) -> i32 {
    %c0_i32 = arith.constant 0 : i32
    %c0_i32_0 = arith.constant 0 : i32
    return %c0_i32 : i32
  }
  func.func @transform_1(%arg0: i32) -> (i32, i32) {
    %c0_i32 = arith.constant 0 : i32
    %c0_i32_0 = arith.constant 0 : i32
    return %arg0, %c0_i32 : i32, i32
  }
  func.func @transform_2(%arg0: i32) -> (i32, i32) {
    %c0_i32 = arith.constant 0 : i32
    %c0_i32_0 = arith.constant 0 : i32
    %c0_i32_1 = arith.constant 0 : i32
    return %c0_i32, %c0_i32_0 : i32, i32
  }
  func.func @transform_3(%arg0: i32) -> (i32, i32) {
    %c0_i32 = arith.constant 0 : i32
    %c0_i32_0 = arith.constant 0 : i32
    %c0_i32_1 = arith.constant 0 : i32
    return %c0_i32, %c0_i32_0 : i32, i32
  }
  func.func @transform_4(%arg0: i32) -> (i32, i32) {
    %c0_i32 = arith.constant 0 : i32
    %c0_i32_0 = arith.constant 0 : i32
    %c0_i32_1 = arith.constant 0 : i32
    return %c0_i32, %c0_i32_0 : i32, i32
  }
  func.func @transform_5(%arg0: i32) -> (i32, i32) {
    %c0_i32 = arith.constant 0 : i32
    %c0_i32_0 = arith.constant 0 : i32
    return %arg0, %c0_i32 : i32, i32
  }
}

</mosaic_0001>

<llo_original>
// kernel: emergent_threshold_forward.1
$region0: #{emergent_threshold_forward.1}
  #allocation0 [shape = 'u32[]', space=smem, size = 0x4, offset = 0x4, fixed_abs, tag = 'smem constant byte address 0x4 - core index']
  #allocation1 [shape = 'u32[144,128]{1,0:T(1,128)}', space=vmem, size = 0x12000, scoped, tag = 'internal scratch']
  #allocation2 [shape = 'f32[1]{0:T(128)S(6)}', space=smem, size = 0x200, scoped, tag = 'scoped memory for emergent_threshold_forward.1']
  %s0 = inlined_call_operand.<no memory space> [shape: f32[1], index: 0, kind: input, shape index: {}]
  %s1 = inlined_call_operand.vmem [shape: f32[16,128], index: 1, kind: input, shape index: {}]
  %s2 = inlined_call_operand.vmem [shape: f32[1,128], index: 2, kind: input, shape index: {}]
  %s3 = inlined_call_operand.vmem [shape: f32[1,128], index: 3, kind: input, shape index: {}]
  %s4 = inlined_call_operand.vmem [shape: f32[1,128], index: 4, kind: input, shape index: {}]
  %s5 = inlined_call_operand.hbm [shape: f32[16,128], index: 5, kind: output, shape index: {}]
  %s6 = sld [smem:[#allocation0]]
  $region53: #{emergent_threshold_forward.1} parent=0
    _
  %s8 = ssub.s32 1, %s6
  %s9 = scalar_select 0, %s8, %s6
  %10 = sst [smem:[#allocation2]] %s0
  $region1: #{emergent_threshold_forward.1} parent=0
    #allocation3 [shape = 'u8[8192]{0}', space=vmem, size = 0x2000, scoped, tag = 'output window, operand 0']
    #allocation4 [shape = 's32[2]{0}', space=sflag, size = 0x8, scoped, tag = 'scoped memory for emergent_threshold_forward.1']
    %11 = vsyncpa [#allocation4], 0
    %s12 = scalar_lea.sflag [#allocation4], 1
    %13 = vsyncpa %s12, 0
    loop: start=0, step=1, limit=4
    $region2: #{emergent_threshold_forward.1} parent=1 // loop_pre_header
      _
    $region3: #{emergent_threshold_forward.1} parent=1 // loop_header
      %s15 = sphi 0, %s19
      %p16 = scmp.ge.s32.totalorder %s15, 4
      %s23 = sphi 0, %s23
      %s25 = sphi 0, %s23
      %s26 = sphi 0, %s25
      %s40 = sphi 0, %s26
      %s46 = sphi 0, %s48
      %s49 = sphi 0, %s46
      %s50 = sphi 0, %s49
      %s66 = sphi 0, %s50
      %s70 = sphi 0, %s70
      %s72 = sphi 0, %s70
      %s73 = sphi 0, %s72
      %s87 = sphi 0, %s73
      %s91 = sphi 0, %s91
      %s93 = sphi 0, %s91
      %s94 = sphi 0, %s93
      %s108 = sphi 0, %s94
      %s112 = sphi 0, %s112
      %s114 = sphi 0, %s112
      %s115 = sphi 0, %s114
      %s129 = sphi 0, %s115
      %s135 = sphi 0, %s137
      %s138 = sphi 0, %s135
      %s139 = sphi 0, %s138
      %s155 = sphi 0, %s139
    $region4: #{emergent_threshold_forward.1} parent=1 // loop_header_branch
      %18 = sbr.rel (%p16) target = $region8
    $region5: #{emergent_threshold_forward.1} parent=1 // loop_body
      %s20 = ssub.s32 %s15, 1
      %s21 = ssub.s32 %s15, 2
      %s22 = sadd.s32 %s15, 1
      %s24 = sadd.s32 %s23, 1
      %p27 = scmp.eq.s32.totalorder %s15, 1
      %p28 = scmp.ne.s32.totalorder %s23, %s25
      %p29 = scmp.eq.s32.totalorder %s15, 0
      %p30 = por %p28, %p29
      %p31 = scmp.ne.s32.totalorder %s23, %s25
      %p32 = scmp.eq.s32.totalorder %s20, 1
      %p33 = por %p31, %p32
      %p34 = scmp.ne.s32.totalorder %s25, %s26
      %p35 = scmp.eq.s32.totalorder %s20, 0
      %p36 = por %p34, %p35
      %p37 = scmp.ne.s32.totalorder %s25, %s26
      %p38 = scmp.eq.s32.totalorder %s21, 1
      %p39 = por %p37, %p38
      %p41 = scmp.ne.s32.totalorder %s26, %s40
      %p42 = scmp.eq.s32.totalorder %s21, 0
      %p43 = por %p41, %p42
      %s44 = ssub.s32 %s15, %s22
      %p45 = scmp.eq.s32.totalorder %s44, 0
      %s47 = sadd.s32 %s46, 1
      %s48 = scalar_select %p45, %s46, %s47
      %p51 = pneg %p45
      %p52 = scmp.eq.s32.totalorder %s15, 1
      %p53 = por %p51, %p52
      %p54 = scmp.ne.s32.totalorder %s46, %s49
      %p55 = scmp.eq.s32.totalorder %s15, 0
      %p56 = por %p54, %p55
      %p57 = scmp.ne.s32.totalorder %s46, %s49
      %p58 = scmp.eq.s32.totalorder %s20, 1
      %p59 = por %p57, %p58
      %p60 = scmp.ne.s32.totalorder %s49, %s50
      %p61 = scmp.eq.s32.totalorder %s20, 0
      %p62 = por %p60, %p61
      %p63 = scmp.ne.s32.totalorder %s49, %s50
      %p64 = scmp.eq.s32.totalorder %s21, 1
      %p65 = por %p63, %p64
      %p67 = scmp.ne.s32.totalorder %s50, %s66
      %p68 = scmp.eq.s32.totalorder %s21, 0
      %p69 = por %p67, %p68
      %s71 = sadd.s32 %s70, 1
      %p74 = scmp.eq.s32.totalorder %s15, 1
      %p75 = scmp.ne.s32.totalorder %s70, %s72
      %p76 = scmp.eq.s32.totalorder %s15, 0
      %p77 = por %p75, %p76
      %p78 = scmp.ne.s32.totalorder %s70, %s72
      %p79 = scmp.eq.s32.totalorder %s20, 1
      %p80 = por %p78, %p79
      %p81 = scmp.ne.s32.totalorder %s72, %s73
      %p82 = scmp.eq.s32.totalorder %s20, 0
      %p83 = por %p81, %p82
      %p84 = scmp.ne.s32.totalorder %s72, %s73
      %p85 = scmp.eq.s32.totalorder %s21, 1
      %p86 = por %p84, %p85
      %p88 = scmp.ne.s32.totalorder %s73, %s87
      %p89 = scmp.eq.s32.totalorder %s21, 0
      %p90 = por %p88, %p89
      %s92 = sadd.s32 %s91, 1
      %p95 = scmp.eq.s32.totalorder %s15, 1
      %p96 = scmp.ne.s32.totalorder %s91, %s93
      %p97 = scmp.eq.s32.totalorder %s15, 0
      %p98 = por %p96, %p97
      %p99 = scmp.ne.s32.totalorder %s91, %s93
      %p100 = scmp.eq.s32.totalorder %s20, 1
      %p101 = por %p99, %p100
      %p102 = scmp.ne.s32.totalorder %s93, %s94
      %p103 = scmp.eq.s32.totalorder %s20, 0
      %p104 = por %p102, %p103
      %p105 = scmp.ne.s32.totalorder %s93, %s94
      %p106 = scmp.eq.s32.totalorder %s21, 1
      %p107 = por %p105, %p106
      %p109 = scmp.ne.s32.totalorder %s94, %s108
      %p110 = scmp.eq.s32.totalorder %s21, 0
      %p111 = por %p109, %p110
      %s113 = sadd.s32 %s112, 1
      %p116 = scmp.eq.s32.totalorder %s15, 1
      %p117 = scmp.ne.s32.totalorder %s112, %s114
      %p118 = scmp.eq.s32.totalorder %s15, 0
      %p119 = por %p117, %p118
      %p120 = scmp.ne.s32.totalorder %s112, %s114
      %p121 = scmp.eq.s32.totalorder %s20, 1
      %p122 = por %p120, %p121
      %p123 = scmp.ne.s32.totalorder %s114, %s115
      %p124 = scmp.eq.s32.totalorder %s20, 0
      %p125 = por %p123, %p124
      %p126 = scmp.ne.s32.totalorder %s114, %s115
      %p127 = scmp.eq.s32.totalorder %s21, 1
      %p128 = por %p126, %p127
      %p130 = scmp.ne.s32.totalorder %s115, %s129
      %p131 = scmp.eq.s32.totalorder %s21, 0
      %p132 = por %p130, %p131
      %s133 = ssub.s32 %s15, %s22
      %p134 = scmp.eq.s32.totalorder %s133, 0
      %s136 = sadd.s32 %s135, 1
      %s137 = scalar_select %p134, %s135, %s136
      %p140 = pneg %p134
      %p141 = scmp.eq.s32.totalorder %s15, 1
      %p142 = por %p140, %p141
      %p143 = scmp.ne.s32.totalorder %s135, %s138
      %p144 = scmp.eq.s32.totalorder %s15, 0
      %p145 = por %p143, %p144
      %p146 = scmp.ne.s32.totalorder %s135, %s138
      %p147 = scmp.eq.s32.totalorder %s20, 1
      %p148 = por %p146, %p147
      %p149 = scmp.ne.s32.totalorder %s138, %s139
      %p150 = scmp.eq.s32.totalorder %s20, 0
      %p151 = por %p149, %p150
      %p152 = scmp.ne.s32.totalorder %s138, %s139
      %p153 = scmp.eq.s32.totalorder %s21, 1
      %p154 = por %p152, %p153
      %p156 = scmp.ne.s32.totalorder %s139, %s155
      %p157 = scmp.eq.s32.totalorder %s21, 0
      %p158 = por %p156, %p157
      %p159 = scmp.le.s32.totalorder 1, %s15
      %p160 = scmp.lt.s32.totalorder %s15, 3
      %p161 = pnand %p159, %p160
      %p162 = pneg %p161
      // Predicated region
      $region9: #{emergent_threshold_forward.1} parent=5 // pred_check
        _
      $region10: #{emergent_threshold_forward.1} parent=5 // pred_check_branch
        %164 = sbr.rel (%p161) target = $region12
      $region11: #{emergent_threshold_forward.1} parent=5 // pred_region
        %s165 = ssub.s32 %s15, 1
        // Predicated region
        $region13: #{emergent_threshold_forward.1} parent=11 // pred_check
          %p166 = pneg %p36
        $region14: #{emergent_threshold_forward.1} parent=11 // pred_check_branch
          %168 = sbr.rel (%p166) target = $region16
        $region15: #{emergent_threshold_forward.1} parent=11 // pred_region
          _
        $region16: #{emergent_threshold_forward.1} parent=11 // pred_fallthru
          _
        // Predicated region
        $region17: #{emergent_threshold_forward.1} parent=11 // pred_check
          %p169 = pneg %p83
        $region18: #{emergent_threshold_forward.1} parent=11 // pred_check_branch
          %171 = sbr.rel (%p169) target = $region20
        $region19: #{emergent_threshold_forward.1} parent=11 // pred_region
          _
        $region20: #{emergent_threshold_forward.1} parent=11 // pred_fallthru
          _
        // Predicated region
        $region21: #{emergent_threshold_forward.1} parent=11 // pred_check
          %p172 = pneg %p104
        $region22: #{emergent_threshold_forward.1} parent=11 // pred_check_branch
          %174 = sbr.rel (%p172) target = $region24
        $region23: #{emergent_threshold_forward.1} parent=11 // pred_region
          _
        $region24: #{emergent_threshold_forward.1} parent=11 // pred_fallthru
          _
        // Predicated region
        $region25: #{emergent_threshold_forward.1} parent=11 // pred_check
          %p175 = pneg %p125
        $region26: #{emergent_threshold_forward.1} parent=11 // pred_check_branch
          %177 = sbr.rel (%p175) target = $region28
        $region27: #{emergent_threshold_forward.1} parent=11 // pred_region
          _
        $region28: #{emergent_threshold_forward.1} parent=11 // pred_fallthru
          _
      $region12: #{emergent_threshold_forward.1} parent=5 // pred_fallthru
        _
      %p178 = scmp.lt.s32.totalorder %s15, 2
      // Predicated region
      $region29: #{emergent_threshold_forward.1} parent=5 // pred_check
        %p179 = pneg %p178
      $region30: #{emergent_threshold_forward.1} parent=5 // pred_check_branch
        %181 = sbr.rel (%p179) target = $region32
      $region31: #{emergent_threshold_forward.1} parent=5 // pred_region
        // Predicated region
        $region33: #{emergent_threshold_forward.1} parent=31 // pred_check
          %p182 = pneg %p56
        $region34: #{emergent_threshold_forward.1} parent=31 // pred_check_branch
          %184 = sbr.rel (%p182) target = $region36
        $region35: #{emergent_threshold_forward.1} parent=31 // pred_region
          %p185 = scmp.lt.s32.totalorder %s15, 1
          %s186 = scalar_select %p185, %s15, 1
          %s187 = smul.addr %s186, 8
          %s188 = scalar_lea.vmem %s1, %s187
        $region36: #{emergent_threshold_forward.1} parent=31 // pred_fallthru
          _
      $region32: #{emergent_threshold_forward.1} parent=5 // pred_fallthru
        _
      %p189 = scmp.le.s32.totalorder 1, %s15
      %p190 = scmp.lt.s32.totalorder %s15, 3
      %p191 = pnand %p189, %p190
      %p192 = pneg %p191
      // Predicated region
      $region37: #{emergent_threshold_forward.1} parent=5 // pred_check
        _
      $region38: #{emergent_threshold_forward.1} parent=5 // pred_check_branch
        %194 = sbr.rel (%p191) target = $region40
      $region39: #{emergent_threshold_forward.1} parent=5 // pred_region
        %s195 = ssub.s32 %s15, 1
        %p196 = pneg %p36
        %p197 = pneg %p33
        %p198 = scmp.lt.s32.totalorder %s20, 1
        %s199 = scalar_select %p198, %s20, 1
        %s200 = smul.addr %s199, 8
        %s201 = scalar_lea.vmem %s1, %s200
        %p202 = pneg %p62
        %p203 = pneg %p59
        %p204 = pneg %p83
        %p205 = pneg %p80
        %p206 = pneg %p104
        %p207 = pneg %p101
        %p208 = pneg %p125
        %p209 = pneg %p122
        %p210 = pneg %p151
        %p211 = pneg %p148
        %s212 = sand.u32 %s138, 1
        %s213 = scalar_lea.sflag [#allocation4], %s212
        %s214 = sand.u32 %s138, 1
        %s215 = smul.addr %s214, 8
        %s216 = scalar_lea.vmem [#allocation3], %s215
        %p217 = scmp.lt.s32.totalorder %s20, 1
        %s218 = scalar_select %p217, %s20, 1
        %s219 = smul.addr %s218, 8
        %s220 = scalar_lea.vmem %s1, %s219
        %v221 = vld [vmem:[%s220] sm:$0xff]
        %222 = vadd.xlane.f32.xlu0 %v221
        %v223 = vpop.xlane.xlu0 %222
        %v224 = vrcp.pop 128.0
        %v225 = vmul.f32 %v223, %v224
        %v226 = vsub.f32 %v221, %v225
        %v227 = vmul.f32 %v226, %v226
        %228 = vadd.xlane.f32.xlu0 %v227
        %v229 = vpop.xlane.xlu0 %228
        %v230 = vmul.f32 %v229, %v224
        %v231 = vadd.f32 %v230, 1e-05
        %v232 = vrsqrt.pop %v231
        %v233 = vmul.f32 %v226, %v232
        %v234 = vld [vmem:[%s2] sm:$0x1]
        %v236 = vlaneseq
        %v237 = vshrl.u32 %v236, 7
        %v238 = vsub.s32 0, %v237
        %v239 = vrot.slane %v234, %v238
        %v241 = vmul.f32 %v233, %v239
        %v242 = vld [vmem:[%s3] sm:$0x1]
        %v244 = vlaneseq
        %v245 = vshrl.u32 %v244, 7
        %v246 = vsub.s32 0, %v245
        %v247 = vrot.slane %v242, %v246
        %v249 = vadd.f32 %v241, %v247
        %v250 = vand.u32 2147483647, %v249
        %v251 = vld [vmem:[%s4] sm:$0x1]
        %v253 = vlaneseq
        %v254 = vshrl.u32 %v253, 7
        %v255 = vsub.s32 0, %v254
        %v256 = vrot.slane %v251, %v255
        %v258 = vsub.f32 %v250, %v256
        %v259 = vxor.u32 %v258, 2147483648
        %v260 = vmul.f32 %v259, 1.442695
        %v261 = vpow.pop %v260
        %v262 = vadd.f32 %v261, 1.0
        %v263 = vrcp.pop %v262
        %v264 = vmul.f32 1.0, %v263
        %s265 = sld [smem:[#allocation2]]
        %v266 = vstv %s265
        %v267 = vmul.f32 %v266, %v264
        %s268 = ssub.f32 1.0, %s265
        %v269 = vstv %s268
        %v270 = vadd.f32 %v267, %v269
        %v271 = vmul.f32 %v221, %v270
        %v272 = vmax.f32 %v271, -100.0
        %v273 = vmin.f32 %v272, 100.0
        %274 = vst [vmem:[%s216] sm:$0xff] %v273
        %s275 = sand.u32 %s138, 1
        %s276 = scalar_lea.sflag [#allocation4], %s275
        %s277 = sand.u32 %s138, 1
        %s278 = smul.addr %s277, 8
        %s279 = scalar_lea.vmem [#allocation3], %s278
        // Predicated region
        $region41: #{emergent_threshold_forward.1} parent=39 // pred_check
          %p280 = pneg %p148
        $region42: #{emergent_threshold_forward.1} parent=39 // pred_check_branch
          %282 = sbr.rel (%p280) target = $region44
        $region43: #{emergent_threshold_forward.1} parent=39 // pred_region
          %s284 = ssub.s32 128, 128
          %285 = vsyncadd %s276, %s284
          %s286 = smul.addr %s20, 128
          %s287 = scalar_lea.hbm %s5, %s286
          %s289 = sshll.u32 %s279, 4
          %s290 = int_to_ptr.vmem [resolvable:$true] %s289
          %292 = dma.vmem_to_hbm [thread:$0]  %s290, 128, %s287, %s276
        $region44: #{emergent_threshold_forward.1} parent=39 // pred_fallthru
          _
      $region40: #{emergent_threshold_forward.1} parent=5 // pred_fallthru
        _
      %p293 = scmp.le.s32.totalorder 2, %s15
      // Predicated region
      $region45: #{emergent_threshold_forward.1} parent=5 // pred_check
        %p294 = pneg %p293
      $region46: #{emergent_threshold_forward.1} parent=5 // pred_check_branch
        %296 = sbr.rel (%p294) target = $region48
      $region47: #{emergent_threshold_forward.1} parent=5 // pred_region
        %s297 = ssub.s32 %s15, 2
        // Predicated region
        $region49: #{emergent_threshold_forward.1} parent=47 // pred_check
          %p298 = pneg %p154
        $region50: #{emergent_threshold_forward.1} parent=47 // pred_check_branch
          %300 = sbr.rel (%p298) target = $region52
        $region51: #{emergent_threshold_forward.1} parent=47 // pred_region
          %s301 = sand.u32 %s139, 1
          %s302 = scalar_lea.sflag [#allocation4], %s301
          %s303 = sand.u32 %s139, 1
          %s304 = smul.addr %s303, 8
          %s305 = scalar_lea.vmem [#allocation3], %s304
          %306 = dma.done %s302, 128
        $region52: #{emergent_threshold_forward.1} parent=47 // pred_fallthru
          _
      $region48: #{emergent_threshold_forward.1} parent=5 // pred_fallthru
        _
    $region6: #{emergent_threshold_forward.1} parent=1 // loop_footer
      %s19 = sadd.s32 1, %s15
    $region7: #{emergent_threshold_forward.1} parent=1 // loop_footer_branch
      %14 = sbr.rel target = $region3
    $region8: #{emergent_threshold_forward.1} parent=1 // loop_exit
      _
    %307 = vsyncpa [#allocation4], 1
    %s308 = scalar_lea.sflag [#allocation4], 1
    %309 = vsyncpa %s308, 1

</llo_original>
